<compile_context>
chip_gen: v7x
topology: tpu7x:2x2x1
jax: 0.10.0
libtpu: 0.0.40
codegen_flags: <defaults>
</compile_context>

<pallas_src>
import jax
import jax.numpy as jnp
import numpy as np
from jax import lax
from jax.experimental import pallas as pl
from jax.experimental.pallas import tpu as pltpu


def cbam_kernel(x_ref, w1_ref, w2_ref, wsa_ref, o_ref):
    # x_ref / o_ref: (Bt, C, L) VMEM; w1_ref: (Ch, C) VMEM; w2_ref: (C, Ch) VMEM;
    # wsa_ref: (2, 3) SMEM (spatial-attention conv weights).
    Bt, C, L = x_ref.shape
    inv_L = jnp.float32(1.0 / L)
    inv_C = jnp.float32(1.0 / C)

    w1 = w1_ref[...]                                   # (Ch, C)
    w2 = w2_ref[...]                                   # (C, Ch)

    # Per-batch (C, L) slabs (C on sublanes, L on lanes), loaded once and reused.
    xs = [x_ref[b] for b in range(Bt)]

    # ---------------- Channel attention (fused avg/max MLP, N = 2*Bt) ----------------
    # pooled columns: [avg_0 .. avg_{Bt-1} | max_0 .. max_{Bt-1}]  ->  (C, 2*Bt)
    avg_cols = [jnp.sum(xb, axis=1, keepdims=True) * inv_L for xb in xs]   # (C, 1)
    max_cols = [jnp.max(xb, axis=1, keepdims=True) for xb in xs]           # (C, 1)
    pooled = jnp.concatenate(avg_cols + max_cols, axis=1)                  # (C, 2*Bt)

    h = jnp.maximum(jnp.dot(w1, pooled, preferred_element_type=jnp.float32), 0.0)  # (Ch, 2Bt)
    y = jnp.dot(w2, h, preferred_element_type=jnp.float32)                          # (C, 2Bt)
    ca = jax.nn.sigmoid(y[:, :Bt] + y[:, Bt:])                                       # (C, Bt)

    outs = [xs[b] * ca[:, b:b + 1] for b in range(Bt)]                     # (C, L) each

    # ---------------- Spatial attention (stacked across the batch tile) ---------------
    avg_rows = [jnp.sum(ob, axis=0, keepdims=True) * inv_C for ob in outs]  # (1, L)
    max_rows = [jnp.max(ob, axis=0, keepdims=True) for ob in outs]          # (1, L)
    avg_c = jnp.concatenate(avg_rows, axis=0)                               # (Bt, L)
    max_c = jnp.concatenate(max_rows, axis=0)                               # (Bt, L)

    zero_col = jnp.zeros((Bt, 1), jnp.float32)

    def tap_left(r):   # r[l-1], zero-padded at l == 0
        return jnp.concatenate([zero_col, r[:, :L - 1]], axis=1)

    def tap_right(r):  # r[l+1], zero-padded at l == L-1
        return jnp.concatenate([r[:, 1:], zero_col], axis=1)

    # Conv1d(2, 1, kernel=3, padding=1, bias=False) as explicit taps; scalars hoisted once.
    w_al, w_ac, w_ar = wsa_ref[0, 0], wsa_ref[0, 1], wsa_ref[0, 2]
    w_ml, w_mc, w_mr = wsa_ref[1, 0], wsa_ref[1, 1], wsa_ref[1, 2]

    sa = jax.nn.sigmoid(
        w_al * tap_left(avg_c) + w_ac * avg_c + w_ar * tap_right(avg_c)
        + w_ml * tap_left(max_c) + w_mc * max_c + w_mr * tap_right(max_c))   # (Bt, L)

    for b in range(Bt):
        o_ref[b] = outs[b] * sa[b:b + 1, :]            # (C, L) * (1, L) -> (C, L)


def _choose_batch_tile(B, C, L, itemsize, target_bytes=2 << 20, max_unroll=8):
    """Largest divisor of B (capped) whose (bt, C, L) block is ~target_bytes."""
    per_batch = max(C * L * itemsize, 1)
    bt = int(max(1, min(B, target_bytes // per_batch, max_unroll)))
    while B % bt:
        bt -= 1
    # Prefer >= 2 grid steps when possible so both v7x TensorCores get work.
    if bt == B and B > 1 and B % 2 == 0:
        bt = B // 2
    return bt


def cbam_pallas(x, w1, w2, wsa, *, block_b=None):
    B, C, L = x.shape
    Ch = w1.shape[0]
    itemsize = x.dtype.itemsize
    if block_b is None:
        block_b = _choose_batch_tile(B, C, L, itemsize)
    assert B % block_b == 0, (B, block_b)
    grid = (B // block_b,)

    block_bytes = block_b * C * L * itemsize
    weight_bytes = (Ch * C + C * Ch) * w1.dtype.itemsize + 6 * 4
    # in + out blocks double-buffered + weights + slack for in-kernel temporaries.
    vmem_needed = 4 * block_bytes + 2 * weight_bytes + (2 << 20)
    vmem_limit = int(min(64 << 20, max(vmem_needed, 16 << 20)))

    cost = pl.CostEstimate(
        flops=int(2 * (2 * B) * C * Ch * 2 + 12 * B * C * L),
        transcendentals=int(B * (C + L)),
        bytes_accessed=int(2 * B * C * L * itemsize + weight_bytes),
    )

    return pl.pallas_call(
        cbam_kernel,
        out_shape=jax.ShapeDtypeStruct((B, C, L), x.dtype),
        grid_spec=pltpu.PrefetchScalarGridSpec(
            num_scalar_prefetch=0,
            grid=grid,
            in_specs=[
                pl.BlockSpec((block_b, C, L), lambda i: (i, 0, 0)),
                pl.BlockSpec((Ch, C), lambda i: (0, 0)),
                pl.BlockSpec((C, Ch), lambda i: (0, 0)),
                pl.BlockSpec(memory_space=pltpu.MemorySpace.SMEM),
            ],
            out_specs=pl.BlockSpec((block_b, C, L), lambda i: (i, 0, 0)),
        ),
        compiler_params=pltpu.CompilerParams(
            dimension_semantics=("parallel",),
            vmem_limit_bytes=vmem_limit,
        ),
        cost_estimate=cost,
    )(x, w1, w2, wsa)


def cbam_reference(x, w1, w2, wsa):
    # Pure-JAX reference mirroring the PyTorch CBAM module.
    avg = jnp.mean(x, axis=2, keepdims=True)   # (B, C, 1)
    mx = jnp.max(x, axis=2, keepdims=True)     # (B, C, 1)

    def mlp(v):
        h = jnp.maximum(jnp.einsum('hc,bcl->bhl', w1, v), 0.0)
        return jnp.einsum('ch,bhl->bcl', w2, h)

    ca = jax.nn.sigmoid(mlp(avg) + mlp(mx))
    out = x * ca

    avg_c = jnp.mean(out, axis=1, keepdims=True)
    max_c = jnp.max(out, axis=1, keepdims=True)
    cat = jnp.concatenate([avg_c, max_c], axis=1)          # (B, 2, L)
    conv = lax.conv_general_dilated(
        cat, wsa[None, :, :],                              # (O=1, I=2, K=3)
        window_strides=(1,), padding=[(1, 1)],
        dimension_numbers=('NCW', 'OIW', 'NCW'))
    sa = jax.nn.sigmoid(conv)                              # (B, 1, L)
    return out * sa


if __name__ == "__main__":
    B, C, L = 4, 8, 256
    ratio = 4
    Ch = C // ratio

    key = jax.random.PRNGKey(0)
    kx, k1, k2, k3 = jax.random.split(key, 4)

    x = jax.random.normal(kx, (B, C, L), dtype=jnp.float32)
    # Weight shapes match nn.Conv1d weights (bias=False), kernel dims squeezed:
    w1 = 0.3 * jax.random.normal(k1, (Ch, C), dtype=jnp.float32)   # fc1: (C//r, C, 1)
    w2 = 0.3 * jax.random.normal(k2, (C, Ch), dtype=jnp.float32)   # fc2: (C, C//r, 1)
    wsa = 0.3 * jax.random.normal(k3, (2, 3), dtype=jnp.float32)   # sa conv: (1, 2, 3)

    out = cbam_pallas(x, w1, w2, wsa)
    out = jax.block_until_ready(out)

    ref = cbam_reference(x, w1, w2, wsa)
    np.testing.assert_allclose(np.asarray(out), np.asarray(ref), rtol=1e-5, atol=1e-5)

    print("KERNEL_OK")
</pallas_src>

<mosaic_0001>
module attributes {stable_mosaic.version = 11 : i64} {
  func.func @cbam_kernel(%arg0: i32, %arg1: memref<2x8x256xf32, #tpu.memory_space<vmem>>, %arg2: memref<2x8xf32, #tpu.memory_space<vmem>>, %arg3: memref<8x2xf32, #tpu.memory_space<vmem>>, %arg4: memref<2x3xf32, #tpu.memory_space<smem>>, %arg5: memref<2x8x256xf32, #tpu.memory_space<vmem>>) attributes {dimension_semantics = [#tpu.dimension_semantics<parallel>], iteration_bounds = array<i64: 2>, scalar_prefetch = 0 : i64, scratch_operands = 0 : i64, tpu.core_type = #tpu.core_type<tc>, window_params = [{transform_indices = @transform_0, window_bounds = array<i64: 2, 8, 256>}, {pipeline_mode = #tpu.pipeline_mode<synchronous>, transform_indices = @transform_1, window_bounds = array<i64: 2, 8>}, {pipeline_mode = #tpu.pipeline_mode<synchronous>, transform_indices = @transform_2, window_bounds = array<i64: 8, 2>}, {transform_indices = @transform_3, window_bounds = array<i64: 2, 3>}, {transform_indices = @transform_4, window_bounds = array<i64: 2, 8, 256>}]} {
    %c0 = arith.constant 0 : index
    %c0_0 = arith.constant 0 : index
    %0 = vector.load %arg2[%c0, %c0_0] : memref<2x8xf32, #tpu.memory_space<vmem>>, vector<2x8xf32>
    %c0_1 = arith.constant 0 : index
    %c0_2 = arith.constant 0 : index
    %1 = vector.load %arg3[%c0_1, %c0_2] : memref<8x2xf32, #tpu.memory_space<vmem>>, vector<8x2xf32>
    %c0_3 = arith.constant 0 : index
    %c0_4 = arith.constant 0 : index
    %c0_5 = arith.constant 0 : index
    %2 = vector.load %arg1[%c0_3, %c0_4, %c0_5] : memref<2x8x256xf32, #tpu.memory_space<vmem>>, vector<1x8x256xf32>
    %3 = vector.shape_cast %2 : vector<1x8x256xf32> to vector<8x256xf32>
    %c1 = arith.constant 1 : index
    %c0_6 = arith.constant 0 : index
    %c0_7 = arith.constant 0 : index
    %4 = vector.load %arg1[%c1, %c0_6, %c0_7] : memref<2x8x256xf32, #tpu.memory_space<vmem>>, vector<1x8x256xf32>
    %5 = vector.shape_cast %4 : vector<1x8x256xf32> to vector<8x256xf32>
    %cst = arith.constant dense<0.000000e+00> : vector<8xf32>
    %6 = vector.multi_reduction <add>, %3, %cst [1] : vector<8x256xf32> to vector<8xf32>
    %7 = vector.shape_cast %6 : vector<8xf32> to vector<8x1xf32>
    %cst_8 = arith.constant 3.906250e-03 : f32
    %8 = vector.broadcast %cst_8 : f32 to vector<8x1xf32>
    %9 = arith.mulf %7, %8 : vector<8x1xf32>
    %cst_9 = arith.constant dense<0.000000e+00> : vector<8xf32>
    %10 = vector.multi_reduction <add>, %5, %cst_9 [1] : vector<8x256xf32> to vector<8xf32>
    %11 = vector.shape_cast %10 : vector<8xf32> to vector<8x1xf32>
    %cst_10 = arith.constant 3.906250e-03 : f32
    %12 = vector.broadcast %cst_10 : f32 to vector<8x1xf32>
    %13 = arith.mulf %11, %12 : vector<8x1xf32>
    %cst_11 = arith.constant dense<0xFF800000> : vector<8xf32>
    %14 = vector.multi_reduction <maximumf>, %3, %cst_11 [1] : vector<8x256xf32> to vector<8xf32>
    %15 = vector.shape_cast %14 : vector<8xf32> to vector<8x1xf32>
    %cst_12 = arith.constant dense<0xFF800000> : vector<8xf32>
    %16 = vector.multi_reduction <maximumf>, %5, %cst_12 [1] : vector<8x256xf32> to vector<8xf32>
    %17 = vector.shape_cast %16 : vector<8xf32> to vector<8x1xf32>
    %18 = tpu.concatenate %9, %13, %15, %17 in 1 : vector<8x1xf32>, vector<8x1xf32>, vector<8x1xf32>, vector<8x1xf32> -> vector<8x4xf32>
    %cst_13 = arith.constant dense<0.000000e+00> : vector<2x4xf32>
    %19 = tpu.matmul %0, %18, %cst_13 {dimension_numbers = #tpu.dot_dimension_numbers<[1], [0], [0], [1], [0, 0, 1, 1], [], []>} : vector<2x8xf32>, vector<8x4xf32>, vector<2x4xf32> -> vector<2x4xf32>
    %cst_14 = arith.constant 0.000000e+00 : f32
    %20 = vector.broadcast %cst_14 : f32 to vector<2x4xf32>
    %21 = arith.maximumf %19, %20 : vector<2x4xf32>
    %cst_15 = arith.constant dense<0.000000e+00> : vector<8x4xf32>
    %22 = tpu.matmul %1, %21, %cst_15 {dimension_numbers = #tpu.dot_dimension_numbers<[1], [0], [0], [1], [0, 0, 1, 1], [], []>} : vector<8x2xf32>, vector<2x4xf32>, vector<8x4xf32> -> vector<8x4xf32>
    %23 = vector.extract_strided_slice %22 {offsets = [0, 0], sizes = [8, 2], strides = [1, 1]} : vector<8x4xf32> to vector<8x2xf32>
    %24 = vector.extract_strided_slice %22 {offsets = [0, 2], sizes = [8, 2], strides = [1, 1]} : vector<8x4xf32> to vector<8x2xf32>
    %25 = arith.addf %23, %24 : vector<8x2xf32>
    %26 = arith.negf %25 : vector<8x2xf32>
    %27 = math.exp %26 : vector<8x2xf32>
    %cst_16 = arith.constant 1.000000e+00 : f32
    %28 = vector.broadcast %cst_16 : f32 to vector<8x2xf32>
    %29 = arith.addf %28, %27 : vector<8x2xf32>
    %30 = arith.divf %28, %29 : vector<8x2xf32>
    %31 = vector.extract_strided_slice %30 {offsets = [0, 0], sizes = [8, 1], strides = [1, 1]} : vector<8x2xf32> to vector<8x1xf32>
    %32 = vector.broadcast %31 : vector<8x1xf32> to vector<8x256xf32>
    %33 = arith.mulf %3, %32 : vector<8x256xf32>
    %34 = vector.extract_strided_slice %30 {offsets = [0, 1], sizes = [8, 1], strides = [1, 1]} : vector<8x2xf32> to vector<8x1xf32>
    %35 = vector.broadcast %34 : vector<8x1xf32> to vector<8x256xf32>
    %36 = arith.mulf %5, %35 : vector<8x256xf32>
    %cst_17 = arith.constant dense<0.000000e+00> : vector<256xf32>
    %37 = vector.multi_reduction <add>, %33, %cst_17 [0] : vector<8x256xf32> to vector<256xf32>
    %38 = vector.shape_cast %37 : vector<256xf32> to vector<1x256xf32>
    %cst_18 = arith.constant 1.250000e-01 : f32
    %39 = vector.broadcast %cst_18 : f32 to vector<1x256xf32>
    %40 = arith.mulf %38, %39 : vector<1x256xf32>
    %cst_19 = arith.constant dense<0.000000e+00> : vector<256xf32>
    %41 = vector.multi_reduction <add>, %36, %cst_19 [0] : vector<8x256xf32> to vector<256xf32>
    %42 = vector.shape_cast %41 : vector<256xf32> to vector<1x256xf32>
    %cst_20 = arith.constant 1.250000e-01 : f32
    %43 = vector.broadcast %cst_20 : f32 to vector<1x256xf32>
    %44 = arith.mulf %42, %43 : vector<1x256xf32>
    %cst_21 = arith.constant dense<0xFF800000> : vector<256xf32>
    %45 = vector.multi_reduction <maximumf>, %33, %cst_21 [0] : vector<8x256xf32> to vector<256xf32>
    %46 = vector.shape_cast %45 : vector<256xf32> to vector<1x256xf32>
    %cst_22 = arith.constant dense<0xFF800000> : vector<256xf32>
    %47 = vector.multi_reduction <maximumf>, %36, %cst_22 [0] : vector<8x256xf32> to vector<256xf32>
    %48 = vector.shape_cast %47 : vector<256xf32> to vector<1x256xf32>
    %49 = tpu.concatenate %40, %44 in 0 : vector<1x256xf32>, vector<1x256xf32> -> vector<2x256xf32>
    %50 = tpu.concatenate %46, %48 in 0 : vector<1x256xf32>, vector<1x256xf32> -> vector<2x256xf32>
    %cst_23 = arith.constant 0.000000e+00 : f32
    %51 = vector.broadcast %cst_23 : f32 to vector<2x1xf32>
    %c0_24 = arith.constant 0 : index
    %c0_25 = arith.constant 0 : index
    %52 = memref.load %arg4[%c0_24, %c0_25] : memref<2x3xf32, #tpu.memory_space<smem>>
    %c0_26 = arith.constant 0 : index
    %c1_27 = arith.constant 1 : index
    %53 = memref.load %arg4[%c0_26, %c1_27] : memref<2x3xf32, #tpu.memory_space<smem>>
    %c0_28 = arith.constant 0 : index
    %c2 = arith.constant 2 : index
    %54 = memref.load %arg4[%c0_28, %c2] : memref<2x3xf32, #tpu.memory_space<smem>>
    %c1_29 = arith.constant 1 : index
    %c0_30 = arith.constant 0 : index
    %55 = memref.load %arg4[%c1_29, %c0_30] : memref<2x3xf32, #tpu.memory_space<smem>>
    %c1_31 = arith.constant 1 : index
    %c1_32 = arith.constant 1 : index
    %56 = memref.load %arg4[%c1_31, %c1_32] : memref<2x3xf32, #tpu.memory_space<smem>>
    %c1_33 = arith.constant 1 : index
    %c2_34 = arith.constant 2 : index
    %57 = memref.load %arg4[%c1_33, %c2_34] : memref<2x3xf32, #tpu.memory_space<smem>>
    %58 = vector.extract_strided_slice %49 {offsets = [0, 0], sizes = [2, 255], strides = [1, 1]} : vector<2x256xf32> to vector<2x255xf32>
    %59 = tpu.concatenate %51, %58 in 1 : vector<2x1xf32>, vector<2x255xf32> -> vector<2x256xf32>
    %60 = vector.broadcast %52 : f32 to vector<2x256xf32>
    %61 = arith.mulf %60, %59 : vector<2x256xf32>
    %62 = vector.broadcast %53 : f32 to vector<2x256xf32>
    %63 = arith.mulf %62, %49 : vector<2x256xf32>
    %64 = arith.addf %61, %63 : vector<2x256xf32>
    %65 = vector.extract_strided_slice %49 {offsets = [0, 1], sizes = [2, 255], strides = [1, 1]} : vector<2x256xf32> to vector<2x255xf32>
    %66 = tpu.concatenate %65, %51 in 1 : vector<2x255xf32>, vector<2x1xf32> -> vector<2x256xf32>
    %67 = vector.broadcast %54 : f32 to vector<2x256xf32>
    %68 = arith.mulf %67, %66 : vector<2x256xf32>
    %69 = arith.addf %64, %68 : vector<2x256xf32>
    %70 = vector.extract_strided_slice %50 {offsets = [0, 0], sizes = [2, 255], strides = [1, 1]} : vector<2x256xf32> to vector<2x255xf32>
    %71 = tpu.concatenate %51, %70 in 1 : vector<2x1xf32>, vector<2x255xf32> -> vector<2x256xf32>
    %72 = vector.broadcast %55 : f32 to vector<2x256xf32>
    %73 = arith.mulf %72, %71 : vector<2x256xf32>
    %74 = arith.addf %69, %73 : vector<2x256xf32>
    %75 = vector.broadcast %56 : f32 to vector<2x256xf32>
    %76 = arith.mulf %75, %50 : vector<2x256xf32>
    %77 = arith.addf %74, %76 : vector<2x256xf32>
    %78 = vector.extract_strided_slice %50 {offsets = [0, 1], sizes = [2, 255], strides = [1, 1]} : vector<2x256xf32> to vector<2x255xf32>
    %79 = tpu.concatenate %78, %51 in 1 : vector<2x255xf32>, vector<2x1xf32> -> vector<2x256xf32>
    %80 = vector.broadcast %57 : f32 to vector<2x256xf32>
    %81 = arith.mulf %80, %79 : vector<2x256xf32>
    %82 = arith.addf %77, %81 : vector<2x256xf32>
    %83 = arith.negf %82 : vector<2x256xf32>
    %84 = math.exp %83 : vector<2x256xf32>
    %cst_35 = arith.constant 1.000000e+00 : f32
    %85 = vector.broadcast %cst_35 : f32 to vector<2x256xf32>
    %86 = arith.addf %85, %84 : vector<2x256xf32>
    %87 = arith.divf %85, %86 : vector<2x256xf32>
    %88 = vector.extract_strided_slice %87 {offsets = [0, 0], sizes = [1, 256], strides = [1, 1]} : vector<2x256xf32> to vector<1x256xf32>
    %89 = vector.broadcast %88 : vector<1x256xf32> to vector<8x256xf32>
    %90 = arith.mulf %33, %89 : vector<8x256xf32>
    %c0_36 = arith.constant 0 : index
    %c0_37 = arith.constant 0 : index
    %c0_38 = arith.constant 0 : index
    %91 = vector.load %arg5[%c0_36, %c0_37, %c0_38] : memref<2x8x256xf32, #tpu.memory_space<vmem>>, vector<1x8x256xf32>
    %92 = vector.shape_cast %91 : vector<1x8x256xf32> to vector<8x256xf32>
    %93 = vector.shape_cast %90 : vector<8x256xf32> to vector<1x8x256xf32>
    tpu.vector_store %arg5[%c0_36, %c0_37, %c0_38], %93 {strides = array<i32>} : memref<2x8x256xf32, #tpu.memory_space<vmem>>, vector<1x8x256xf32>,
    %94 = vector.extract_strided_slice %87 {offsets = [1, 0], sizes = [1, 256], strides = [1, 1]} : vector<2x256xf32> to vector<1x256xf32>
    %95 = vector.broadcast %94 : vector<1x256xf32> to vector<8x256xf32>
    %96 = arith.mulf %36, %95 : vector<8x256xf32>
    %c1_39 = arith.constant 1 : index
    %c0_40 = arith.constant 0 : index
    %c0_41 = arith.constant 0 : index
    %97 = vector.load %arg5[%c1_39, %c0_40, %c0_41] : memref<2x8x256xf32, #tpu.memory_space<vmem>>, vector<1x8x256xf32>
    %98 = vector.shape_cast %97 : vector<1x8x256xf32> to vector<8x256xf32>
    %99 = vector.shape_cast %96 : vector<8x256xf32> to vector<1x8x256xf32>
    tpu.vector_store %arg5[%c1_39, %c0_40, %c0_41], %99 {strides = array<i32>} : memref<2x8x256xf32, #tpu.memory_space<vmem>>, vector<1x8x256xf32>,
    return
  }
  func.func @transform_0(%arg0: i32) -> (i32, i32, i32) {
    %c0_i32 = arith.constant 0 : i32
    %c0_i32_0 = arith.constant 0 : i32
    %c0_i32_1 = arith.constant 0 : i32
    return %arg0, %c0_i32, %c0_i32_0 : i32, i32, i32
  }
  func.func @transform_1(%arg0: i32) -> (i32, i32) {
    %c0_i32 = arith.constant 0 : i32
    %c0_i32_0 = arith.constant 0 : i32
    %c0_i32_1 = arith.constant 0 : i32
    return %c0_i32, %c0_i32_0 : i32, i32
  }
  func.func @transform_2(%arg0: i32) -> (i32, i32) {
    %c0_i32 = arith.constant 0 : i32
    %c0_i32_0 = arith.constant 0 : i32
    %c0_i32_1 = arith.constant 0 : i32
    return %c0_i32, %c0_i32_0 : i32, i32
  }
  func.func @transform_3(%arg0: i32) -> (i32, i32) {
    %c0_i32 = arith.constant 0 : i32
    %c0_i32_0 = arith.constant 0 : i32
    %c0_i32_1 = arith.constant 0 : i32
    return %c0_i32, %c0_i32_0 : i32, i32
  }
  func.func @transform_4(%arg0: i32) -> (i32, i32, i32) {
    %c0_i32 = arith.constant 0 : i32
    %c0_i32_0 = arith.constant 0 : i32
    %c0_i32_1 = arith.constant 0 : i32
    return %arg0, %c0_i32, %c0_i32_0 : i32, i32, i32
  }
}

</mosaic_0001>

<llo_original>
// kernel: tpu_custom_call.1
$region0: #{tpu_custom_call.1}
  #allocation0 [shape = 'u32[]', space=smem, size = 0x4, offset = 0x4, fixed_abs, tag = 'smem constant byte address 0x4 - core index']
  #allocation1 [shape = 'u32[144,128]{1,0:T(1,128)}', space=vmem, size = 0x12000, scoped, tag = 'internal scratch']
  %s0 = inlined_call_operand.hbm [shape: f32[4,8,256], index: 0, kind: input, shape index: {}]
  %s1 = inlined_call_operand.vmem [shape: f32[2,8], index: 1, kind: input, shape index: {}]
  %s2 = inlined_call_operand.vmem [shape: f32[8,2], index: 2, kind: input, shape index: {}]
  %s3 = inlined_call_operand.vmem [shape: f32[2,3], index: 3, kind: input, shape index: {}]
  %s4 = inlined_call_operand.hbm [shape: f32[4,8,256], index: 4, kind: output, shape index: {}]
  %s5 = sld [smem:[#allocation0]]
  $region57: #{tpu_custom_call.1} parent=0
    _
  %s7 = ssub.s32 1, %s5
  %s8 = scalar_select 0, %s7, %s5
  $region1: #{tpu_custom_call.1} parent=0
    #allocation2 [shape = 'u8[32768]{0}', space=vmem, size = 0x8000, scoped, tag = 'input window, operand 0']
    #allocation3 [shape = 's32[2]{0}', space=sflag, size = 0x8, scoped, tag = 'scoped memory for tpu_custom_call.1']
    #allocation4 [shape = 's32[2]{0}', space=sflag, size = 0x8, scoped, tag = 'scoped memory for tpu_custom_call.1']
    #allocation5 [shape = 's32[2]{0}', space=sflag, size = 0x8, scoped, tag = 'scoped memory for tpu_custom_call.1']
    #allocation6 [shape = 'u8[1024]{0}', space=smem, size = 0x400, scoped, tag = 'input window, operand 3, single buffered']
    #allocation7 [shape = 'u8[32768]{0}', space=vmem, size = 0x8000, scoped, tag = 'output window, operand 0']
    %9 = vsyncpa [#allocation3], 0
    %s10 = scalar_lea.sflag [#allocation3], 1
    %11 = vsyncpa %s10, 0
    %12 = vsyncpa [#allocation5], 0
    %13 = vsyncpa [#allocation4], 0
    %s14 = scalar_lea.sflag [#allocation4], 1
    %15 = vsyncpa %s14, 0
    loop: start=0, step=1, limit=4
    $region2: #{tpu_custom_call.1} parent=1 // loop_pre_header
      _
    $region3: #{tpu_custom_call.1} parent=1 // loop_header
      %s17 = sphi 0, %s21
      %p18 = scmp.ge.s32.totalorder %s17, 4
      %s27 = sphi 0, %s29
      %s30 = sphi 0, %s27
      %s31 = sphi 0, %s30
      %s47 = sphi 0, %s31
      %s51 = sphi 0, %s51
      %s53 = sphi 0, %s51
      %s54 = sphi 0, %s53
      %s68 = sphi 0, %s54
      %s72 = sphi 0, %s72
      %s74 = sphi 0, %s72
      %s75 = sphi 0, %s74
      %s89 = sphi 0, %s75
      %s93 = sphi 0, %s93
      %s95 = sphi 0, %s93
      %s96 = sphi 0, %s95
      %s110 = sphi 0, %s96
      %s116 = sphi 0, %s118
      %s119 = sphi 0, %s116
      %s120 = sphi 0, %s119
      %s136 = sphi 0, %s120
    $region4: #{tpu_custom_call.1} parent=1 // loop_header_branch
      %20 = sbr.rel (%p18) target = $region8
    $region5: #{tpu_custom_call.1} parent=1 // loop_body
      %s22 = ssub.s32 %s17, 1
      %s23 = ssub.s32 %s17, 2
      %s24 = sadd.s32 %s17, 1
      %s25 = ssub.s32 %s17, %s24
      %p26 = scmp.eq.s32.totalorder %s25, 0
      %s28 = sadd.s32 %s27, 1
      %s29 = scalar_select %p26, %s27, %s28
      %p32 = pneg %p26
      %p33 = scmp.eq.s32.totalorder %s17, 1
      %p34 = por %p32, %p33
      %p35 = scmp.ne.s32.totalorder %s27, %s30
      %p36 = scmp.eq.s32.totalorder %s17, 0
      %p37 = por %p35, %p36
      %p38 = scmp.ne.s32.totalorder %s27, %s30
      %p39 = scmp.eq.s32.totalorder %s22, 1
      %p40 = por %p38, %p39
      %p41 = scmp.ne.s32.totalorder %s30, %s31
      %p42 = scmp.eq.s32.totalorder %s22, 0
      %p43 = por %p41, %p42
      %p44 = scmp.ne.s32.totalorder %s30, %s31
      %p45 = scmp.eq.s32.totalorder %s23, 1
      %p46 = por %p44, %p45
      %p48 = scmp.ne.s32.totalorder %s31, %s47
      %p49 = scmp.eq.s32.totalorder %s23, 0
      %p50 = por %p48, %p49
      %s52 = sadd.s32 %s51, 1
      %p55 = scmp.eq.s32.totalorder %s17, 1
      %p56 = scmp.ne.s32.totalorder %s51, %s53
      %p57 = scmp.eq.s32.totalorder %s17, 0
      %p58 = por %p56, %p57
      %p59 = scmp.ne.s32.totalorder %s51, %s53
      %p60 = scmp.eq.s32.totalorder %s22, 1
      %p61 = por %p59, %p60
      %p62 = scmp.ne.s32.totalorder %s53, %s54
      %p63 = scmp.eq.s32.totalorder %s22, 0
      %p64 = por %p62, %p63
      %p65 = scmp.ne.s32.totalorder %s53, %s54
      %p66 = scmp.eq.s32.totalorder %s23, 1
      %p67 = por %p65, %p66
      %p69 = scmp.ne.s32.totalorder %s54, %s68
      %p70 = scmp.eq.s32.totalorder %s23, 0
      %p71 = por %p69, %p70
      %s73 = sadd.s32 %s72, 1
      %p76 = scmp.eq.s32.totalorder %s17, 1
      %p77 = scmp.ne.s32.totalorder %s72, %s74
      %p78 = scmp.eq.s32.totalorder %s17, 0
      %p79 = por %p77, %p78
      %p80 = scmp.ne.s32.totalorder %s72, %s74
      %p81 = scmp.eq.s32.totalorder %s22, 1
      %p82 = por %p80, %p81
      %p83 = scmp.ne.s32.totalorder %s74, %s75
      %p84 = scmp.eq.s32.totalorder %s22, 0
      %p85 = por %p83, %p84
      %p86 = scmp.ne.s32.totalorder %s74, %s75
      %p87 = scmp.eq.s32.totalorder %s23, 1
      %p88 = por %p86, %p87
      %p90 = scmp.ne.s32.totalorder %s75, %s89
      %p91 = scmp.eq.s32.totalorder %s23, 0
      %p92 = por %p90, %p91
      %s94 = sadd.s32 %s93, 1
      %p97 = scmp.eq.s32.totalorder %s17, 1
      %p98 = scmp.ne.s32.totalorder %s93, %s95
      %p99 = scmp.eq.s32.totalorder %s17, 0
      %p100 = por %p98, %p99
      %p101 = scmp.ne.s32.totalorder %s93, %s95
      %p102 = scmp.eq.s32.totalorder %s22, 1
      %p103 = por %p101, %p102
      %p104 = scmp.ne.s32.totalorder %s95, %s96
      %p105 = scmp.eq.s32.totalorder %s22, 0
      %p106 = por %p104, %p105
      %p107 = scmp.ne.s32.totalorder %s95, %s96
      %p108 = scmp.eq.s32.totalorder %s23, 1
      %p109 = por %p107, %p108
      %p111 = scmp.ne.s32.totalorder %s96, %s110
      %p112 = scmp.eq.s32.totalorder %s23, 0
      %p113 = por %p111, %p112
      %s114 = ssub.s32 %s17, %s24
      %p115 = scmp.eq.s32.totalorder %s114, 0
      %s117 = sadd.s32 %s116, 1
      %s118 = scalar_select %p115, %s116, %s117
      %p121 = pneg %p115
      %p122 = scmp.eq.s32.totalorder %s17, 1
      %p123 = por %p121, %p122
      %p124 = scmp.ne.s32.totalorder %s116, %s119
      %p125 = scmp.eq.s32.totalorder %s17, 0
      %p126 = por %p124, %p125
      %p127 = scmp.ne.s32.totalorder %s116, %s119
      %p128 = scmp.eq.s32.totalorder %s22, 1
      %p129 = por %p127, %p128
      %p130 = scmp.ne.s32.totalorder %s119, %s120
      %p131 = scmp.eq.s32.totalorder %s22, 0
      %p132 = por %p130, %p131
      %p133 = scmp.ne.s32.totalorder %s119, %s120
      %p134 = scmp.eq.s32.totalorder %s23, 1
      %p135 = por %p133, %p134
      %p137 = scmp.ne.s32.totalorder %s120, %s136
      %p138 = scmp.eq.s32.totalorder %s23, 0
      %p139 = por %p137, %p138
      %p140 = scmp.le.s32.totalorder 1, %s17
      %p141 = scmp.lt.s32.totalorder %s17, 3
      %p142 = pnand %p140, %p141
      %p143 = pneg %p142
      // Predicated region
      $region9: #{tpu_custom_call.1} parent=5 // pred_check
        _
      $region10: #{tpu_custom_call.1} parent=5 // pred_check_branch
        %145 = sbr.rel (%p142) target = $region12
      $region11: #{tpu_custom_call.1} parent=5 // pred_region
        %s146 = ssub.s32 %s17, 1
        // Predicated region
        $region13: #{tpu_custom_call.1} parent=11 // pred_check
          %p147 = pneg %p64
        $region14: #{tpu_custom_call.1} parent=11 // pred_check_branch
          %149 = sbr.rel (%p147) target = $region16
        $region15: #{tpu_custom_call.1} parent=11 // pred_region
          _
        $region16: #{tpu_custom_call.1} parent=11 // pred_fallthru
          _
        // Predicated region
        $region17: #{tpu_custom_call.1} parent=11 // pred_check
          %p150 = pneg %p85
        $region18: #{tpu_custom_call.1} parent=11 // pred_check_branch
          %152 = sbr.rel (%p150) target = $region20
        $region19: #{tpu_custom_call.1} parent=11 // pred_region
          _
        $region20: #{tpu_custom_call.1} parent=11 // pred_fallthru
          _
        // Predicated region
        $region21: #{tpu_custom_call.1} parent=11 // pred_check
          %p153 = pneg %p106
        $region22: #{tpu_custom_call.1} parent=11 // pred_check_branch
          %155 = sbr.rel (%p153) target = $region24
        $region23: #{tpu_custom_call.1} parent=11 // pred_region
          %s157 = ssub.s32 32, 32
          %158 = vsyncadd [#allocation5], %s157
          %s160 = sshll.u32 %s3, 4
          %s161 = int_to_ptr.vmem [resolvable:$true] %s160
          %163 = dma.vmem_to_smem %s161, 32, [#allocation6], [#allocation5]
        $region24: #{tpu_custom_call.1} parent=11 // pred_fallthru
          _
      $region12: #{tpu_custom_call.1} parent=5 // pred_fallthru
        _
      %p164 = scmp.lt.s32.totalorder %s17, 2
      // Predicated region
      $region25: #{tpu_custom_call.1} parent=5 // pred_check
        %p165 = pneg %p164
      $region26: #{tpu_custom_call.1} parent=5 // pred_check_branch
        %167 = sbr.rel (%p165) target = $region28
      $region27: #{tpu_custom_call.1} parent=5 // pred_region
        // Predicated region
        $region29: #{tpu_custom_call.1} parent=27 // pred_check
          %p168 = pneg %p37
        $region30: #{tpu_custom_call.1} parent=27 // pred_check_branch
          %170 = sbr.rel (%p168) target = $region32
        $region31: #{tpu_custom_call.1} parent=27 // pred_region
          %s171 = sand.u32 %s27, 1
          %s172 = scalar_lea.sflag [#allocation3], %s171
          %s173 = sand.u32 %s27, 1
          %s174 = smul.addr %s173, 32
          %s175 = scalar_lea.vmem [#allocation2], %s174
          %s176 = smul.u32 2, %s17
          %s178 = ssub.s32 512, 512
          %179 = vsyncadd %s172, %s178
          %s180 = smul.addr %s176, 2
          %s181 = smul.addr %s180, 128
          %s182 = scalar_lea.hbm %s0, %s181
          %s183 = sshll.u32 %s175, 4
          %s184 = int_to_ptr.vmem [resolvable:$true] %s183
          %189 = dma.hbm_to_vmem [thread:$0]  %s182, 512, %s184, %s172, 256, 256, 16
        $region32: #{tpu_custom_call.1} parent=27 // pred_fallthru
          _
      $region28: #{tpu_custom_call.1} parent=5 // pred_fallthru
        _
      %p190 = scmp.le.s32.totalorder 1, %s17
      %p191 = scmp.lt.s32.totalorder %s17, 3
      %p192 = pnand %p190, %p191
      %p193 = pneg %p192
      // Predicated region
      $region33: #{tpu_custom_call.1} parent=5 // pred_check
        _
      $region34: #{tpu_custom_call.1} parent=5 // pred_check_branch
        %195 = sbr.rel (%p192) target = $region36
      $region35: #{tpu_custom_call.1} parent=5 // pred_region
        %s196 = ssub.s32 %s17, 1
        %s197 = sand.u32 %s30, 1
        %s198 = scalar_lea.sflag [#allocation3], %s197
        %s199 = sand.u32 %s30, 1
        %s200 = smul.addr %s199, 32
        %s201 = scalar_lea.vmem [#allocation2], %s200
        // Predicated region
        $region37: #{tpu_custom_call.1} parent=35 // pred_check
          %p202 = pneg %p43
        $region38: #{tpu_custom_call.1} parent=35 // pred_check_branch
          %204 = sbr.rel (%p202) target = $region40
        $region39: #{tpu_custom_call.1} parent=35 // pred_region
          %205 = dma.done %s198, 512
        $region40: #{tpu_custom_call.1} parent=35 // pred_fallthru
          _
        // Predicated region
        $region41: #{tpu_custom_call.1} parent=35 // pred_check
          %p206 = pneg %p106
        $region42: #{tpu_custom_call.1} parent=35 // pred_check_branch
          %208 = sbr.rel (%p206) target = $region44
        $region43: #{tpu_custom_call.1} parent=35 // pred_region
          %209 = dma.done [#allocation5], 32
        $region44: #{tpu_custom_call.1} parent=35 // pred_fallthru
          _
        %210 = sfence
        %s211 = sand.u32 %s30, 1
        %s212 = scalar_lea.sflag [#allocation3], %s211
        %s213 = sand.u32 %s30, 1
        %s214 = smul.addr %s213, 32
        %s215 = scalar_lea.vmem [#allocation2], %s214
        %p216 = pneg %p43
        %p217 = pneg %p40
        %p218 = pneg %p64
        %p219 = pneg %p61
        %p220 = pneg %p85
        %p221 = pneg %p82
        %p222 = pneg %p106
        %p223 = pneg %p103
        %p224 = pneg %p132
        %p225 = pneg %p129
        %s226 = sand.u32 %s119, 1
        %s227 = scalar_lea.sflag [#allocation4], %s226
        %s228 = sand.u32 %s119, 1
        %s229 = smul.addr %s228, 32
        %s230 = scalar_lea.vmem [#allocation7], %s229
        %s231 = smul.u32 2, %s22
        %s232 = smul.u32 2, %s22
        %v233 = vld [vmem:[%s1] sm:$0x3]
        %v234 = vld [vmem:[%s2] sm:$0xff]
        %v235 = vld [vmem:[%s201] sm:$0xff]
        %v236 = vld [vmem:[%s201 + $0x8] sm:$0xff]
        %s237 = scalar_lea.vmem %s201, 16 [#allocation2]
        %v238 = vld [vmem:[%s237] sm:$0xff]
        %v239 = vld [vmem:[%s237 + $0x8] sm:$0xff]
        %v240 = vadd.f32 %v235, %v236
        %241 = vadd.xlane.f32.xlu0 %v240
        %v242 = vpop.xlane.xlu0 %241
        %v243 = vmul.f32 %v242, 0.00390625
        %v244 = vadd.f32 %v238, %v239
        %245 = vadd.xlane.f32.xlu0 %v244
        %v246 = vpop.xlane.xlu0 %245
        %v247 = vmul.f32 %v246, 0.00390625
        %v248 = vmax.f32 %v235, %v236
        %249 = vmax.xlane.f32.xlu0 %v248
        %v250 = vpop.xlane.xlu0 %249
        %v251 = vmax.f32 %v238, %v239
        %252 = vmax.xlane.f32.xlu0 %v251
        %v253 = vpop.xlane.xlu0 %252
        %vm254 = vcmask 7168
        %v255 = vsel %vm254, %v243, %v247
        %vm256 = vcmask 15360
        %v257 = vsel %vm256, %v255, %v250
        %vm258 = vcmask 23552
        %v259 = vsel %vm258, %v257, %v253
        %vm260 = vcmask 64512
        %v262 = vsel %vm260, %v233, 0
        %264 = vmatprep.subr.mxu0 0.0
        %265 = vmatpush1.msra.mxu0 %v259
        %266 = vmatprep.subr.mxu0 0.0
        %267 = vmatpush1.msra.mxu0 0.0
        %268 = vmatprep.subr.mxu0 0.0
        %269 = vmatpush1.msra.mxu0 0.0
        %270 = vmatprep.subr.mxu0 0.0
        %271 = vmatpush1.msra.mxu0 0.0
        %272 = vmatprep.subr.mxu0 0.0
        %273 = vmatpush1.msra.mxu0 0.0
        %274 = vmatprep.subr.mxu0 0.0
        %275 = vmatpush1.msra.mxu0 0.0
        %276 = vmatprep.subr.mxu0 0.0
        %277 = vmatpush1.msra.mxu0 0.0
        %278 = vmatprep.subr.mxu0 0.0
        %279 = vmatpush1.msra.mxu0 0.0
        %280 = vmatprep.subr.mxu0 0.0
        %281 = vmatpush1.msra.mxu0 0.0
        %282 = vmatprep.subr.mxu0 0.0
        %283 = vmatpush1.msra.mxu0 0.0
        %284 = vmatprep.subr.mxu0 0.0
        %285 = vmatpush1.msra.mxu0 0.0
        %286 = vmatprep.subr.mxu0 0.0
        %287 = vmatpush1.msra.mxu0 0.0
        %288 = vmatprep.subr.mxu0 0.0
        %289 = vmatpush1.msra.mxu0 0.0
        %290 = vmatprep.subr.mxu0 0.0
        %291 = vmatpush1.msra.mxu0 0.0
        %292 = vmatprep.subr.mxu0 0.0
        %293 = vmatpush1.msra.mxu0 0.0
        %294 = vmatprep.subr.mxu0 0.0
        %295 = vmatpush1.msra.mxu0 0.0
        %296 = vmatprep.subr.mxu0 0.0
        %297 = vmatpush1.msra.mxu0 0.0
        %298 = vmatprep.subr.mxu0 0.0
        %299 = vmatpush1.msra.mxu0 0.0
        %300 = vmatprep.subr.mxu0 0.0
        %301 = vmatpush1.msra.mxu0 0.0
        %302 = vmatprep.subr.mxu0 0.0
        %303 = vmatpush1.msra.mxu0 0.0
        %304 = vmatprep.subr.mxu0 0.0
        %305 = vmatpush1.msra.mxu0 0.0
        %306 = vmatprep.subr.mxu0 0.0
        %307 = vmatpush1.msra.mxu0 0.0
        %308 = vmatprep.subr.mxu0 0.0
        %309 = vmatpush1.msra.mxu0 0.0
        %310 = vmatprep.subr.mxu0 0.0
        %311 = vmatpush1.msra.mxu0 0.0
        %312 = vmatprep.subr.mxu0 0.0
        %313 = vmatpush1.msra.mxu0 0.0
        %314 = vmatprep.subr.mxu0 0.0
        %315 = vmatpush1.msra.mxu0 0.0
        %316 = vmatprep.subr.mxu0 0.0
        %317 = vmatpush1.msra.mxu0 0.0
        %318 = vmatprep.subr.mxu0 0.0
        %319 = vmatpush1.msra.mxu0 0.0
        %320 = vmatprep.subr.mxu0 0.0
        %321 = vmatpush1.msra.mxu0 0.0
        %322 = vmatprep.subr.mxu0 0.0
        %323 = vmatpush1.msra.mxu0 0.0
        %324 = vmatprep.subr.mxu0 0.0
        %325 = vmatpush1.msra.mxu0 0.0
        %326 = vmatprep.subr.mxu0 0.0
        %327 = vmatpush1.msra.mxu0 0.0
        %328 = vmatprep.mubr.f32.mxu0 0.0
        %329 = vmatmul.mubr.f32.gmra.mrb[0].mxu0 %v262
        %v330 = vpop.f32.mrb[0].mxu0
        %v331 = vadd.f32 0.0, %v330
        %v332 = vpop.f32.mrb[0].mxu0
        %333 = vdwg.mxu0
        %v334 = vmax.f32 %v331, 0.0
        %v336 = vsel %vm256, %v234, 0
        %vm338 = vcmask 1041408
        %v340 = vsel %vm338, %v334, 0
        %342 = vmatprep.subr.mxu0 0.0
        %343 = vmatpush1.msra.mxu0 %v340
        %344 = vmatprep.subr.mxu0 0.0
        %345 = vmatpush1.msra.mxu0 0.0
        %346 = vmatprep.subr.mxu0 0.0
        %347 = vmatpush1.msra.mxu0 0.0
        %348 = vmatprep.subr.mxu0 0.0
        %349 = vmatpush1.msra.mxu0 0.0
        %350 = vmatprep.subr.mxu0 0.0
        %351 = vmatpush1.msra.mxu0 0.0
        %352 = vmatprep.subr.mxu0 0.0
        %353 = vmatpush1.msra.mxu0 0.0
        %354 = vmatprep.subr.mxu0 0.0
        %355 = vmatpush1.msra.mxu0 0.0
        %356 = vmatprep.subr.mxu0 0.0
        %357 = vmatpush1.msra.mxu0 0.0
        %358 = vmatprep.subr.mxu0 0.0
        %359 = vmatpush1.msra.mxu0 0.0
        %360 = vmatprep.subr.mxu0 0.0
        %361 = vmatpush1.msra.mxu0 0.0
        %362 = vmatprep.subr.mxu0 0.0
        %363 = vmatpush1.msra.mxu0 0.0
        %364 = vmatprep.subr.mxu0 0.0
        %365 = vmatpush1.msra.mxu0 0.0
        %366 = vmatprep.subr.mxu0 0.0
        %367 = vmatpush1.msra.mxu0 0.0
        %368 = vmatprep.subr.mxu0 0.0
        %369 = vmatpush1.msra.mxu0 0.0
        %370 = vmatprep.subr.mxu0 0.0
        %371 = vmatpush1.msra.mxu0 0.0
        %372 = vmatprep.subr.mxu0 0.0
        %373 = vmatpush1.msra.mxu0 0.0
        %374 = vmatprep.subr.mxu0 0.0
        %375 = vmatpush1.msra.mxu0 0.0
        %376 = vmatprep.subr.mxu0 0.0
        %377 = vmatpush1.msra.mxu0 0.0
        %378 = vmatprep.subr.mxu0 0.0
        %379 = vmatpush1.msra.mxu0 0.0
        %380 = vmatprep.subr.mxu0 0.0
        %381 = vmatpush1.msra.mxu0 0.0
        %382 = vmatprep.subr.mxu0 0.0
        %383 = vmatpush1.msra.mxu0 0.0
        %384 = vmatprep.subr.mxu0 0.0
        %385 = vmatpush1.msra.mxu0 0.0
        %386 = vmatprep.subr.mxu0 0.0
        %387 = vmatpush1.msra.mxu0 0.0
        %388 = vmatprep.subr.mxu0 0.0
        %389 = vmatpush1.msra.mxu0 0.0
        %390 = vmatprep.subr.mxu0 0.0
        %391 = vmatpush1.msra.mxu0 0.0
        %392 = vmatprep.subr.mxu0 0.0
        %393 = vmatpush1.msra.mxu0 0.0
        %394 = vmatprep.subr.mxu0 0.0
        %395 = vmatpush1.msra.mxu0 0.0
        %396 = vmatprep.subr.mxu0 0.0
        %397 = vmatpush1.msra.mxu0 0.0
        %398 = vmatprep.subr.mxu0 0.0
        %399 = vmatpush1.msra.mxu0 0.0
        %400 = vmatprep.subr.mxu0 0.0
        %401 = vmatpush1.msra.mxu0 0.0
        %402 = vmatprep.subr.mxu0 0.0
        %403 = vmatpush1.msra.mxu0 0.0
        %404 = vmatprep.subr.mxu0 0.0
        %405 = vmatpush1.msra.mxu0 0.0
        %406 = vmatprep.mubr.f32.mxu0 0.0
        %407 = vmatmul.mubr.f32.gmra.mrb[0].mxu0 %v336
        %v408 = vpop.f32.mrb[0].mxu0
        %v409 = vadd.f32 0.0, %v408
        %v410 = vpop.f32.mrb[0].mxu0
        %411 = vdwg.mxu0
        %413 = vrot.lane.b32.xlu0 %v409, 126
        %v414 = vpop.permute.xlu0 %413
        %v416 = vadd.f32 %v409, %v414
        %v417 = vxor.u32 %v416, 2147483648
        %v418 = vmul.f32 %v417, 1.442695
        %v419 = vpow.pop %v418
        %v420 = vadd.f32 %v419, 1.0
        %v421 = vrcp.pop %v420
        %v422 = vmul.f32 1.0, %v421
        %424 = vset.pattern.permute.xlu0 0
        %425 = vperm.xlu0 %424, %v422
        %v426 = vpop.permute.xlu0 %425
        %v428 = vmul.f32 %v235, %v426
        %v429 = vmul.f32 %v236, %v426
        %430 = vset.pattern.permute.xlu0 1
        %431 = vperm.xlu0 %430, %v422
        %v432 = vpop.permute.xlu0 %431
        %v434 = vmul.f32 %v238, %v432
        %v435 = vmul.f32 %v239, %v432
        %v436 = vrot.slane %v428, 4
        %v437 = vadd.f32 %v428, %v436
        %v438 = vrot.slane %v437, 2
        %v439 = vadd.f32 %v437, %v438
        %v440 = vrot.slane %v439, 1
        %v441 = vadd.f32 %v439, %v440
        %v442 = vrot.slane %v429, 4
        %v443 = vadd.f32 %v429, %v442
        %v444 = vrot.slane %v443, 2
        %v445 = vadd.f32 %v443, %v444
        %v446 = vrot.slane %v445, 1
        %v447 = vadd.f32 %v445, %v446
        %v448 = vmul.f32 %v441, 0.125
        %v449 = vmul.f32 %v447, 0.125
        %v450 = vrot.slane %v434, 4
        %v451 = vadd.f32 %v434, %v450
        %v452 = vrot.slane %v451, 2
        %v453 = vadd.f32 %v451, %v452
        %v454 = vrot.slane %v453, 1
        %v455 = vadd.f32 %v453, %v454
        %v456 = vrot.slane %v435, 4
        %v457 = vadd.f32 %v435, %v456
        %v458 = vrot.slane %v457, 2
        %v459 = vadd.f32 %v457, %v458
        %v460 = vrot.slane %v459, 1
        %v461 = vadd.f32 %v459, %v460
        %v462 = vmul.f32 %v455, 0.125
        %v463 = vmul.f32 %v461, 0.125
        %v464 = vrot.slane %v428, 4
        %v465 = vmax.f32 %v428, %v464
        %v466 = vrot.slane %v465, 2
        %v467 = vmax.f32 %v465, %v466
        %v468 = vrot.slane %v467, 1
        %v469 = vmax.f32 %v467, %v468
        %v470 = vrot.slane %v429, 4
        %v471 = vmax.f32 %v429, %v470
        %v472 = vrot.slane %v471, 2
        %v473 = vmax.f32 %v471, %v472
        %v474 = vrot.slane %v473, 1
        %v475 = vmax.f32 %v473, %v474
        %v476 = vrot.slane %v434, 4
        %v477 = vmax.f32 %v434, %v476
        %v478 = vrot.slane %v477, 2
        %v479 = vmax.f32 %v477, %v478
        %v480 = vrot.slane %v479, 1
        %v481 = vmax.f32 %v479, %v480
        %v482 = vrot.slane %v435, 4
        %v483 = vmax.f32 %v435, %v482
        %v484 = vrot.slane %v483, 2
        %v485 = vmax.f32 %v483, %v484
        %v486 = vrot.slane %v485, 1
        %v487 = vmax.f32 %v485, %v486
        %vm488 = vcmask 1040384
        %v489 = vsel %vm488, %v448, %v462
        %v490 = vsel %vm488, %v449, %v463
        %v491 = vsel %vm488, %v469, %v481
        %v492 = vsel %vm488, %v475, %v487
        %s493 = sld [smem:[#allocation6]]
        %s494 = sld [smem:[#allocation6 + $0x1]]
        %s495 = sld [smem:[#allocation6 + $0x2]]
        %s496 = sld [smem:[#allocation6 + $0x80]]
        %s497 = sld [smem:[#allocation6 + $0x81]]
        %s498 = sld [smem:[#allocation6 + $0x82]]
        %501 = vrot.lane.b32.xlu0 %v489, 1
        %v502 = vpop.permute.xlu0 %501
        %503 = vrot.lane.b32.xlu0 %v490, 1
        %v504 = vpop.permute.xlu0 %503
        %v505 = vsel %vm254, %v502, %v504
        %v508 = vsel %vm254, 0.0, %v502
        %v509 = vstv %s493
        %v510 = vmul.f32 %v509, %v508
        %v511 = vmul.f32 %v509, %v505
        %v512 = vstv %s494
        %v513 = vmul.f32 %v512, %v489
        %v514 = vmul.f32 %v512, %v490
        %v515 = vadd.f32 %v510, %v513
        %v516 = vadd.f32 %v511, %v514
        %517 = vrot.lane.b32.xlu0 %v489, 127
        %v518 = vpop.permute.xlu0 %517
        %519 = vrot.lane.b32.xlu0 %v490, 127
        %v520 = vpop.permute.xlu0 %519
        %vm521 = vcmask 1039360
        %v522 = vsel %vm521, %v518, %v520
        %v525 = vsel %vm521, %v520, 0.0
        %v526 = vstv %s495
        %v527 = vmul.f32 %v526, %v522
        %v528 = vmul.f32 %v526, %v525
        %v529 = vadd.f32 %v515, %v527
        %v530 = vadd.f32 %v516, %v528
        %533 = vrot.lane.b32.xlu0 %v491, 1
        %v534 = vpop.permute.xlu0 %533
        %535 = vrot.lane.b32.xlu0 %v492, 1
        %v536 = vpop.permute.xlu0 %535
        %v537 = vsel %vm254, %v534, %v536
        %v540 = vsel %vm254, 0.0, %v534
        %v541 = vstv %s496
        %v542 = vmul.f32 %v541, %v540
        %v543 = vmul.f32 %v541, %v537
        %v544 = vadd.f32 %v529, %v542
        %v545 = vadd.f32 %v530, %v543
        %v546 = vstv %s497
        %v547 = vmul.f32 %v546, %v491
        %v548 = vmul.f32 %v546, %v492
        %v549 = vadd.f32 %v544, %v547
        %v550 = vadd.f32 %v545, %v548
        %551 = vrot.lane.b32.xlu0 %v491, 127
        %v552 = vpop.permute.xlu0 %551
        %553 = vrot.lane.b32.xlu0 %v492, 127
        %v554 = vpop.permute.xlu0 %553
        %v555 = vsel %vm521, %v552, %v554
        %v558 = vsel %vm521, %v554, 0.0
        %v559 = vstv %s498
        %v560 = vmul.f32 %v559, %v555
        %v561 = vmul.f32 %v559, %v558
        %v562 = vadd.f32 %v549, %v560
        %v563 = vadd.f32 %v550, %v561
        %v564 = vxor.u32 %v562, 2147483648
        %v565 = vxor.u32 %v563, 2147483648
        %v566 = vmul.f32 %v564, 1.442695
        %v567 = vpow.pop %v566
        %v568 = vmul.f32 %v565, 1.442695
        %v569 = vpow.pop %v568
        %v570 = vadd.f32 %v567, 1.0
        %v571 = vadd.f32 %v569, 1.0
        %v572 = vrcp.pop %v570
        %v573 = vmul.f32 1.0, %v572
        %v574 = vrcp.pop %v571
        %v575 = vmul.f32 1.0, %v574
        %v576 = vlaneseq
        %v577 = vshrl.u32 %v576, 7
        %v578 = vsub.s32 0, %v577
        %v579 = vrot.slane %v573, %v578
        %v580 = vlaneseq
        %v581 = vshrl.u32 %v580, 7
        %v582 = vsub.s32 0, %v581
        %v583 = vrot.slane %v575, %v582
        %v584 = vmul.f32 %v428, %v579
        %v585 = vmul.f32 %v429, %v583
        %586 = vst [vmem:[%s230] sm:$0xff] %v584
        %587 = vst [vmem:[%s230 + $0x8] sm:$0xff] %v585
        %v588 = vlaneseq
        %v589 = vshrl.u32 %v588, 7
        %v590 = vsub.s32 1, %v589
        %v591 = vrot.slane %v573, %v590
        %v592 = vlaneseq
        %v593 = vshrl.u32 %v592, 7
        %v594 = vsub.s32 1, %v593
        %v595 = vrot.slane %v575, %v594
        %v596 = vmul.f32 %v434, %v591
        %v597 = vmul.f32 %v435, %v595
        %s598 = scalar_lea.vmem %s230, 16 [#allocation7]
        %599 = vst [vmem:[%s598] sm:$0xff] %v596
        %600 = vst [vmem:[%s598 + $0x8] sm:$0xff] %v597
        %s601 = sand.u32 %s119, 1
        %s602 = scalar_lea.sflag [#allocation4], %s601
        %s603 = sand.u32 %s119, 1
        %s604 = smul.addr %s603, 32
        %s605 = scalar_lea.vmem [#allocation7], %s604
        // Predicated region
        $region45: #{tpu_custom_call.1} parent=35 // pred_check
          %p606 = pneg %p129
        $region46: #{tpu_custom_call.1} parent=35 // pred_check_branch
          %608 = sbr.rel (%p606) target = $region48
        $region47: #{tpu_custom_call.1} parent=35 // pred_region
          %s609 = smul.u32 2, %s22
          %s611 = ssub.s32 512, 512
          %612 = vsyncadd %s602, %s611
          %s613 = smul.addr %s609, 2
          %s614 = smul.addr %s613, 128
          %s615 = scalar_lea.hbm %s4, %s614
          %s616 = sshll.u32 %s605, 4
          %s617 = int_to_ptr.vmem [resolvable:$true] %s616
          %622 = dma.vmem_to_hbm [thread:$0]  %s617, 512, %s615, %s602, 256, 256, 16
        $region48: #{tpu_custom_call.1} parent=35 // pred_fallthru
          _
      $region36: #{tpu_custom_call.1} parent=5 // pred_fallthru
        _
      %p623 = scmp.le.s32.totalorder 2, %s17
      // Predicated region
      $region49: #{tpu_custom_call.1} parent=5 // pred_check
        %p624 = pneg %p623
      $region50: #{tpu_custom_call.1} parent=5 // pred_check_branch
        %626 = sbr.rel (%p624) target = $region52
      $region51: #{tpu_custom_call.1} parent=5 // pred_region
        %s627 = ssub.s32 %s17, 2
        // Predicated region
        $region53: #{tpu_custom_call.1} parent=51 // pred_check
          %p628 = pneg %p135
        $region54: #{tpu_custom_call.1} parent=51 // pred_check_branch
          %630 = sbr.rel (%p628) target = $region56
        $region55: #{tpu_custom_call.1} parent=51 // pred_region
          %s631 = sand.u32 %s120, 1
          %s632 = scalar_lea.sflag [#allocation4], %s631
          %s633 = sand.u32 %s120, 1
          %s634 = smul.addr %s633, 32
          %s635 = scalar_lea.vmem [#allocation7], %s634
          %636 = dma.done %s632, 512
        $region56: #{tpu_custom_call.1} parent=51 // pred_fallthru
          _
      $region52: #{tpu_custom_call.1} parent=5 // pred_fallthru
        _
    $region6: #{tpu_custom_call.1} parent=1 // loop_footer
      %s21 = sadd.s32 1, %s17
    $region7: #{tpu_custom_call.1} parent=1 // loop_footer_branch
      %16 = sbr.rel target = $region3
    $region8: #{tpu_custom_call.1} parent=1 // loop_exit
      _
    %637 = vsyncpa [#allocation3], 1
    %s638 = scalar_lea.sflag [#allocation3], 1
    %639 = vsyncpa %s638, 1
    %640 = vsyncpa [#allocation4], 1
    %s641 = scalar_lea.sflag [#allocation4], 1
    %642 = vsyncpa %s641, 1
    %643 = vsyncpa [#allocation5], 1
    %s644 = scalar_lea.sflag [#allocation5], 1
    %645 = vsyncpa %s644, 1

</llo_original>
